<compile_context>
chip_gen: v7x
topology: tpu7x:2x2x1
jax: 0.10.0
libtpu: 0.0.40
codegen_flags: <defaults>
</compile_context>

<pallas_src>
import numpy as np
import jax
import jax.numpy as jnp
from jax.experimental import pallas as pl
from jax.experimental.pallas import tpu as pltpu


def _round_up(x, m):
    return (x + m - 1) // m * m


# ---------------------------------------------------------------------------
# One-time parameter packing (init time, not per forward call)
# ---------------------------------------------------------------------------
def pack_params(w1, b1, w2, b2, w3, b3, obs_dim):
    """Pack (in,out)-layout weights and (1,out) biases into one f32 slab."""
    d_in, L1 = w1.shape
    n_act = d_in - obs_dim
    L2 = w2.shape[1]
    Dout = w3.shape[1]

    w3_rows = 1 if Dout == 1 else L2            # Dout==1 -> store q-head transposed as a row
    sizes = [obs_dim, n_act, 1, L1, 1, w3_rows, 1]
    offs, r = [], 0
    for s in sizes:                              # 8-sublane-aligned section starts
        offs.append(r)
        r += _round_up(s, 8)
    R = r
    C = _round_up(max(L1, L2, Dout), 128)        # lane-multiple column padding

    slab = jnp.zeros((R, C), jnp.float32)

    def put(s, off, arr):
        return s.at[off:off + arr.shape[0], :arr.shape[1]].set(arr)

    slab = put(slab, offs[0], w1[:obs_dim])      # W1 obs-part
    slab = put(slab, offs[1], w1[obs_dim:])      # W1 act-part  (fused concat)
    slab = put(slab, offs[2], b1.reshape(1, L1))
    slab = put(slab, offs[3], w2)
    slab = put(slab, offs[4], b2.reshape(1, L2))
    if Dout == 1:
        slab = put(slab, offs[5], w3.reshape(1, L2))   # q-head weights as a row
    else:
        slab = put(slab, offs[5], w3)
    slab = put(slab, offs[6], b3.reshape(1, Dout))

    meta = dict(obs_dim=obs_dim, n_act=n_act, L1=L1, L2=L2, Dout=Dout, offs=tuple(offs))
    return slab, meta


# ---------------------------------------------------------------------------
# Kernel: fused 3-layer MLP over one batch tile; params are static slices of
# the single packed slab (zero-cost views, one DMA for all weights/biases).
# ---------------------------------------------------------------------------
def _make_kernel(obs_dim, n_act, L1, L2, Dout, offs):
    oWo, oWa, oB1, oW2, oB2, oW3, oB3 = offs

    def kernel(obs_ref, act_ref, p_ref, q_ref):
        w1o = p_ref[oWo:oWo + obs_dim, :L1]
        w1a = p_ref[oWa:oWa + n_act, :L1]
        b1 = p_ref[oB1:oB1 + 1, :L1]
        w2 = p_ref[oW2:oW2 + L1, :L2]
        b2 = p_ref[oB2:oB2 + 1, :L2]
        b3 = p_ref[oB3:oB3 + 1, :Dout]

        # layer1: concat fused as obs-part + act-part matmuls
        h1 = (jnp.dot(obs_ref[...], w1o, preferred_element_type=jnp.float32)
              + jnp.dot(act_ref[...], w1a, preferred_element_type=jnp.float32)
              + b1)
        h1 = jnp.maximum(h1, 0.0)

        # layer2
        h2 = jnp.dot(h1, w2, preferred_element_type=jnp.float32) + b2
        h2 = jnp.maximum(h2, 0.0)

        # q head
        if Dout == 1:
            # VPU multiply + lane reduction instead of an N=1 MXU matmul.
            w3_row = p_ref[oW3:oW3 + 1, :L2]
            q = jnp.sum(h2 * w3_row, axis=-1, keepdims=True) + b3
        else:
            w3 = p_ref[oW3:oW3 + L2, :Dout]
            q = jnp.dot(h2, w3, preferred_element_type=jnp.float32) + b3

        q_ref[...] = q.astype(q_ref.dtype)

    return kernel


# ---------------------------------------------------------------------------
# Wrapper: batch-tiled pallas_call
# ---------------------------------------------------------------------------
def critic_forward(observation, action, packed, meta, *, max_tile=512):
    """observation: (B, input_dims), action: (B, n_actions) -> (B, output_dims)."""
    obs_dim, n_act = meta["obs_dim"], meta["n_act"]
    L1, L2, Dout = meta["L1"], meta["L2"], meta["Dout"]
    offs = meta["offs"]

    B = observation.shape[0]
    TB = min(max_tile, _round_up(B, 8))          # batch tile (sublane multiple)
    Bp = _round_up(B, TB)
    if Bp != B:                                   # pad ragged batch (static decision)
        observation = jnp.pad(observation, ((0, Bp - B), (0, 0)))
        action = jnp.pad(action, ((0, Bp - B), (0, 0)))

    kernel = _make_kernel(obs_dim, n_act, L1, L2, Dout, offs)

    out = pl.pallas_call(
        kernel,
        out_shape=jax.ShapeDtypeStruct((Bp, Dout), jnp.float32),
        grid=(Bp // TB,),
        in_specs=[
            pl.BlockSpec((TB, obs_dim), lambda i: (i, 0)),
            pl.BlockSpec((TB, n_act), lambda i: (i, 0)),
            pl.BlockSpec(packed.shape, lambda i: (0, 0)),   # same block every step -> VMEM-resident
        ],
        out_specs=pl.BlockSpec((TB, Dout), lambda i: (i, 0)),
        compiler_params=pltpu.CompilerParams(
            dimension_semantics=("parallel",)),               # lets v7x use both TCs
    )(observation, action, packed)

    return out[:B] if Bp != B else out


# ---------------------------------------------------------------------------
# Deterministic parameter init (mirrors init_layer_weights: U(-w, w)),
# weights in (in, out) layout, biases as (1, out).
# ---------------------------------------------------------------------------
def make_params(key, input_dims, n_actions, layer1_dims, layer2_dims, output_dims):
    d_in = input_dims + n_actions
    keys = jax.random.split(key, 6)

    def uniform(k, shape, bound):
        return jax.random.uniform(k, shape, jnp.float32, -bound, bound)

    w1_bound = 1.0 / np.sqrt(layer1_dims)
    w2_bound = 1.0 / np.sqrt(layer2_dims)
    q_bound = 0.003

    w1 = uniform(keys[0], (d_in, layer1_dims), w1_bound)
    b1 = uniform(keys[1], (1, layer1_dims), w1_bound)
    w2 = uniform(keys[2], (layer1_dims, layer2_dims), w2_bound)
    b2 = uniform(keys[3], (1, layer2_dims), w2_bound)
    w3 = uniform(keys[4], (layer2_dims, output_dims), q_bound)
    b3 = uniform(keys[5], (1, output_dims), q_bound)
    return (w1, b1, w2, b2, w3, b3)


# Pure-JAX reference for the correctness check.
def critic_ref(observation, action, params):
    w1, b1, w2, b2, w3, b3 = params
    x = jnp.concatenate([observation, action], axis=1)
    h1 = jnp.maximum(x @ w1 + b1, 0.0)
    h2 = jnp.maximum(h1 @ w2 + b2, 0.0)
    return h2 @ w3 + b3


if __name__ == "__main__":
    batch = 8
    input_dims = 16
    n_actions = 4
    layer1_dims = 64
    layer2_dims = 32
    output_dims = 1

    key = jax.random.PRNGKey(0)
    k_obs, k_act, k_par = jax.random.split(key, 3)

    observation = jax.random.normal(k_obs, (batch, input_dims), jnp.float32)
    action = jax.random.normal(k_act, (batch, n_actions), jnp.float32)

    raw_params = make_params(k_par, input_dims, n_actions,
                             layer1_dims, layer2_dims, output_dims)
    packed, meta = pack_params(*raw_params, obs_dim=input_dims)

    q = critic_forward(observation, action, packed, meta)
    q = jax.block_until_ready(q)

    q_ref = critic_ref(observation, action, raw_params)
    np.testing.assert_allclose(np.asarray(q), np.asarray(q_ref), rtol=1e-5, atol=1e-5)

    print("KERNEL_OK")
</pallas_src>

<mosaic_0001>
module attributes {stable_mosaic.version = 11 : i64} {
  func.func @kernel(%arg0: i32, %arg1: memref<8x16xf32, #tpu.memory_space<vmem>>, %arg2: memref<8x4xf32, #tpu.memory_space<vmem>>, %arg3: memref<120x128xf32, #tpu.memory_space<vmem>>, %arg4: memref<8x1xf32, #tpu.memory_space<vmem>>) attributes {dimension_semantics = [#tpu.dimension_semantics<parallel>], iteration_bounds = array<i64: 1>, scalar_prefetch = 0 : i64, scratch_operands = 0 : i64, tpu.core_type = #tpu.core_type<tc>, window_params = [{transform_indices = @transform_0, window_bounds = array<i64: 8, 16>}, {transform_indices = @transform_1, window_bounds = array<i64: 8, 4>}, {pipeline_mode = #tpu.pipeline_mode<synchronous>, transform_indices = @transform_2, window_bounds = array<i64: 120, 128>}, {transform_indices = @transform_3, window_bounds = array<i64: 8, 1>}]} {
    %c0 = arith.constant 0 : index
    %c0_0 = arith.constant 0 : index
    %0 = vector.load %arg3[%c0, %c0_0] : memref<120x128xf32, #tpu.memory_space<vmem>>, vector<16x64xf32>
    %c16 = arith.constant 16 : index
    %c0_1 = arith.constant 0 : index
    %1 = vector.load %arg3[%c16, %c0_1] : memref<120x128xf32, #tpu.memory_space<vmem>>, vector<4x64xf32>
    %c24 = arith.constant 24 : index
    %c0_2 = arith.constant 0 : index
    %2 = vector.load %arg3[%c24, %c0_2] : memref<120x128xf32, #tpu.memory_space<vmem>>, vector<1x64xf32>
    %c32 = arith.constant 32 : index
    %c0_3 = arith.constant 0 : index
    %3 = vector.load %arg3[%c32, %c0_3] : memref<120x128xf32, #tpu.memory_space<vmem>>, vector<64x32xf32>
    %c96 = arith.constant 96 : index
    %c0_4 = arith.constant 0 : index
    %4 = vector.load %arg3[%c96, %c0_4] : memref<120x128xf32, #tpu.memory_space<vmem>>, vector<1x32xf32>
    %c112 = arith.constant 112 : index
    %c0_5 = arith.constant 0 : index
    %5 = vector.load %arg3[%c112, %c0_5] : memref<120x128xf32, #tpu.memory_space<vmem>>, vector<1x1xf32>
    %c0_6 = arith.constant 0 : index
    %c0_7 = arith.constant 0 : index
    %6 = vector.load %arg1[%c0_6, %c0_7] : memref<8x16xf32, #tpu.memory_space<vmem>>, vector<8x16xf32>
    %cst = arith.constant dense<0.000000e+00> : vector<8x64xf32>
    %7 = tpu.matmul %6, %0, %cst {dimension_numbers = #tpu.dot_dimension_numbers<[1], [0], [0], [1], [0, 0, 1, 1], [], []>} : vector<8x16xf32>, vector<16x64xf32>, vector<8x64xf32> -> vector<8x64xf32>
    %c0_8 = arith.constant 0 : index
    %c0_9 = arith.constant 0 : index
    %8 = vector.load %arg2[%c0_8, %c0_9] : memref<8x4xf32, #tpu.memory_space<vmem>>, vector<8x4xf32>
    %cst_10 = arith.constant dense<0.000000e+00> : vector<8x64xf32>
    %9 = tpu.matmul %8, %1, %cst_10 {dimension_numbers = #tpu.dot_dimension_numbers<[1], [0], [0], [1], [0, 0, 1, 1], [], []>} : vector<8x4xf32>, vector<4x64xf32>, vector<8x64xf32> -> vector<8x64xf32>
    %10 = arith.addf %7, %9 : vector<8x64xf32>
    %11 = vector.broadcast %2 : vector<1x64xf32> to vector<8x64xf32>
    %12 = arith.addf %10, %11 : vector<8x64xf32>
    %cst_11 = arith.constant 0.000000e+00 : f32
    %13 = vector.broadcast %cst_11 : f32 to vector<8x64xf32>
    %14 = arith.maximumf %12, %13 : vector<8x64xf32>
    %cst_12 = arith.constant dense<0.000000e+00> : vector<8x32xf32>
    %15 = tpu.matmul %14, %3, %cst_12 {dimension_numbers = #tpu.dot_dimension_numbers<[1], [0], [0], [1], [0, 0, 1, 1], [], []>} : vector<8x64xf32>, vector<64x32xf32>, vector<8x32xf32> -> vector<8x32xf32>
    %16 = vector.broadcast %4 : vector<1x32xf32> to vector<8x32xf32>
    %17 = arith.addf %15, %16 : vector<8x32xf32>
    %cst_13 = arith.constant 0.000000e+00 : f32
    %18 = vector.broadcast %cst_13 : f32 to vector<8x32xf32>
    %19 = arith.maximumf %17, %18 : vector<8x32xf32>
    %c104 = arith.constant 104 : index
    %c0_14 = arith.constant 0 : index
    %20 = vector.load %arg3[%c104, %c0_14] : memref<120x128xf32, #tpu.memory_space<vmem>>, vector<1x32xf32>
    %21 = vector.broadcast %20 : vector<1x32xf32> to vector<8x32xf32>
    %22 = arith.mulf %19, %21 : vector<8x32xf32>
    %cst_15 = arith.constant dense<0.000000e+00> : vector<8xf32>
    %23 = vector.multi_reduction <add>, %22, %cst_15 [1] : vector<8x32xf32> to vector<8xf32>
    %24 = vector.shape_cast %23 : vector<8xf32> to vector<8x1xf32>
    %25 = vector.broadcast %5 : vector<1x1xf32> to vector<8x1xf32>
    %26 = arith.addf %24, %25 : vector<8x1xf32>
    %c0_16 = arith.constant 0 : index
    %c0_17 = arith.constant 0 : index
    %27 = vector.load %arg4[%c0_16, %c0_17] : memref<8x1xf32, #tpu.memory_space<vmem>>, vector<8x1xf32>
    tpu.vector_store %arg4[%c0_16, %c0_17], %26 {strides = array<i32>} : memref<8x1xf32, #tpu.memory_space<vmem>>, vector<8x1xf32>,
    return
  }
  func.func @transform_0(%arg0: i32) -> (i32, i32) {
    %c0_i32 = arith.constant 0 : i32
    %c0_i32_0 = arith.constant 0 : i32
    return %arg0, %c0_i32 : i32, i32
  }
  func.func @transform_1(%arg0: i32) -> (i32, i32) {
    %c0_i32 = arith.constant 0 : i32
    %c0_i32_0 = arith.constant 0 : i32
    return %arg0, %c0_i32 : i32, i32
  }
  func.func @transform_2(%arg0: i32) -> (i32, i32) {
    %c0_i32 = arith.constant 0 : i32
    %c0_i32_0 = arith.constant 0 : i32
    %c0_i32_1 = arith.constant 0 : i32
    return %c0_i32, %c0_i32_0 : i32, i32
  }
  func.func @transform_3(%arg0: i32) -> (i32, i32) {
    %c0_i32 = arith.constant 0 : i32
    %c0_i32_0 = arith.constant 0 : i32
    return %arg0, %c0_i32 : i32, i32
  }
}

</mosaic_0001>

<llo_original>
// kernel: tpu_custom_call.1
$region0: #{tpu_custom_call.1}
  #allocation0 [shape = 'u32[]', space=smem, size = 0x4, offset = 0x4, fixed_abs, tag = 'smem constant byte address 0x4 - core index']
  #allocation1 [shape = 'u32[144,128]{1,0:T(1,128)}', space=vmem, size = 0x12000, scoped, tag = 'internal scratch']
  %s0 = inlined_call_operand.vmem [shape: f32[8,16], index: 0, kind: input, shape index: {}]
  %s1 = inlined_call_operand.vmem [shape: f32[8,4], index: 1, kind: input, shape index: {}]
  %s2 = inlined_call_operand.hbm [shape: f32[120,128], index: 2, kind: input, shape index: {}]
  %s3 = inlined_call_operand.vmem [shape: f32[8,1], index: 3, kind: output, shape index: {}]
  %s4 = sld [smem:[#allocation0]]
  $region26: #{tpu_custom_call.1} parent=0
    _
  %s6 = ssub.s32 1, %s4
  %s7 = scalar_select 0, %s6, %s4
  $region1: #{tpu_custom_call.1} parent=0
    #allocation2 [shape = 'u8[61440]{0}', space=vmem, size = 0xf000, scoped, tag = 'input window, operand 2, single buffered']
    #allocation3 [shape = 's32[1]{0}', space=sflag, size = 0x4, scoped, tag = 'scoped memory for tpu_custom_call.1']
    %8 = vsyncpa [#allocation3], 0
    // Predicated region
    $region2: #{tpu_custom_call.1} parent=1 // pred_check
      _
    $region3: #{tpu_custom_call.1} parent=1 // pred_check_branch
      %10 = sbr.rel (0) target = $region5
    $region4: #{tpu_custom_call.1} parent=1 // pred_region
      _
    $region5: #{tpu_custom_call.1} parent=1 // pred_fallthru
      _
    // Predicated region
    $region6: #{tpu_custom_call.1} parent=1 // pred_check
      _
    $region7: #{tpu_custom_call.1} parent=1 // pred_check_branch
      %12 = sbr.rel (0) target = $region9
    $region8: #{tpu_custom_call.1} parent=1 // pred_region
      _
    $region9: #{tpu_custom_call.1} parent=1 // pred_fallthru
      _
    // Predicated region
    $region10: #{tpu_custom_call.1} parent=1 // pred_check
      _
    $region11: #{tpu_custom_call.1} parent=1 // pred_check_branch
      %14 = sbr.rel (0) target = $region13
    $region12: #{tpu_custom_call.1} parent=1 // pred_region
      %s16 = ssub.s32 1920, 1920
      %17 = vsyncadd [#allocation3], %s16
      %s18 = sshll.u32 [#allocation2], 4
      %s19 = int_to_ptr.vmem [resolvable:$true] %s18
      %24 = dma.hbm_to_vmem [thread:$0]  %s2, 1920, %s19, [#allocation3], 128, 128, 8
    $region13: #{tpu_custom_call.1} parent=1 // pred_fallthru
      _
    // Predicated region
    $region14: #{tpu_custom_call.1} parent=1 // pred_check
      _
    $region15: #{tpu_custom_call.1} parent=1 // pred_check_branch
      %26 = sbr.rel (0) target = $region17
    $region16: #{tpu_custom_call.1} parent=1 // pred_region
      %27 = dma.done [#allocation3], 1920
    $region17: #{tpu_custom_call.1} parent=1 // pred_fallthru
      _
    %v28 = vld [vmem:[#allocation2] sm:$0xff]
    %v29 = vld [vmem:[#allocation2 + $0x8] sm:$0xff]
    %v30 = vld [vmem:[#allocation2 + $0x10] sm:$0xf]
    %v31 = vld [vmem:[#allocation2 + $0x18] sm:$0x1]
    %v32 = vld [vmem:[#allocation2 + $0x20] sm:$0xff]
    %v33 = vld [vmem:[#allocation2 + $0x28] sm:$0xff]
    %v34 = vld [vmem:[#allocation2 + $0x30] sm:$0xff]
    %v35 = vld [vmem:[#allocation2 + $0x38] sm:$0xff]
    %v36 = vld [vmem:[#allocation2 + $0x40] sm:$0xff]
    %v37 = vld [vmem:[#allocation2 + $0x48] sm:$0xff]
    %v38 = vld [vmem:[#allocation2 + $0x50] sm:$0xff]
    %v39 = vld [vmem:[#allocation2 + $0x58] sm:$0xff]
    %v40 = vld [vmem:[#allocation2 + $0x60] sm:$0x1]
    %v41 = vld [vmem:[#allocation2 + $0x70] sm:$0x1]
    %v42 = vld [vmem:[%s0] sm:$0xff]
    %v43 = vld [vmem:[%s1] sm:$0xff]
    %vm44 = vcmask 31744
    %v46 = vsel %vm44, %v43, 0
    %vm48 = vcmask 1043456
    %v50 = vsel %vm48, %v30, 0
    %52 = vmatprep.subr.mxu0 0.0
    %53 = vmatpush1.msra.mxu0 %v50
    %54 = vmatprep.subr.mxu0 0.0
    %55 = vmatpush1.msra.mxu0 0.0
    %56 = vmatprep.subr.mxu0 0.0
    %57 = vmatpush1.msra.mxu0 0.0
    %58 = vmatprep.subr.mxu0 0.0
    %59 = vmatpush1.msra.mxu0 0.0
    %60 = vmatprep.subr.mxu0 0.0
    %61 = vmatpush1.msra.mxu0 0.0
    %62 = vmatprep.subr.mxu0 0.0
    %63 = vmatpush1.msra.mxu0 0.0
    %64 = vmatprep.subr.mxu0 0.0
    %65 = vmatpush1.msra.mxu0 0.0
    %66 = vmatprep.subr.mxu0 0.0
    %67 = vmatpush1.msra.mxu0 0.0
    %68 = vmatprep.subr.mxu0 0.0
    %69 = vmatpush1.msra.mxu0 0.0
    %70 = vmatprep.subr.mxu0 0.0
    %71 = vmatpush1.msra.mxu0 0.0
    %72 = vmatprep.subr.mxu0 0.0
    %73 = vmatpush1.msra.mxu0 0.0
    %74 = vmatprep.subr.mxu0 0.0
    %75 = vmatpush1.msra.mxu0 0.0
    %76 = vmatprep.subr.mxu0 0.0
    %77 = vmatpush1.msra.mxu0 0.0
    %78 = vmatprep.subr.mxu0 0.0
    %79 = vmatpush1.msra.mxu0 0.0
    %80 = vmatprep.subr.mxu0 0.0
    %81 = vmatpush1.msra.mxu0 0.0
    %82 = vmatprep.subr.mxu0 0.0
    %83 = vmatpush1.msra.mxu0 0.0
    %84 = vmatprep.subr.mxu0 0.0
    %85 = vmatpush1.msra.mxu0 0.0
    %86 = vmatprep.subr.mxu0 0.0
    %87 = vmatpush1.msra.mxu0 0.0
    %88 = vmatprep.subr.mxu0 0.0
    %89 = vmatpush1.msra.mxu0 0.0
    %90 = vmatprep.subr.mxu0 0.0
    %91 = vmatpush1.msra.mxu0 0.0
    %92 = vmatprep.subr.mxu0 0.0
    %93 = vmatpush1.msra.mxu0 0.0
    %94 = vmatprep.subr.mxu0 0.0
    %95 = vmatpush1.msra.mxu0 0.0
    %96 = vmatprep.subr.mxu0 0.0
    %97 = vmatpush1.msra.mxu0 0.0
    %98 = vmatprep.subr.mxu0 0.0
    %99 = vmatpush1.msra.mxu0 0.0
    %100 = vmatprep.subr.mxu0 0.0
    %101 = vmatpush1.msra.mxu0 0.0
    %102 = vmatprep.subr.mxu0 0.0
    %103 = vmatpush1.msra.mxu0 0.0
    %104 = vmatprep.subr.mxu0 0.0
    %105 = vmatpush1.msra.mxu0 0.0
    %106 = vmatprep.subr.mxu0 0.0
    %107 = vmatpush1.msra.mxu0 0.0
    %108 = vmatprep.subr.mxu0 0.0
    %109 = vmatpush1.msra.mxu0 0.0
    %110 = vmatprep.subr.mxu0 0.0
    %111 = vmatpush1.msra.mxu0 0.0
    %112 = vmatprep.subr.mxu0 0.0
    %113 = vmatpush1.msra.mxu0 0.0
    %114 = vmatprep.subr.mxu0 0.0
    %115 = vmatpush1.msra.mxu0 0.0
    %116 = vmatprep.mubr.f32.mxu0 0.0
    %117 = vmatmul.mubr.f32.gmra.mrb[0].mxu0 %v46
    %v118 = vpop.f32.mrb[0].mxu0
    %v119 = vadd.f32 0.0, %v118
    %v120 = vpop.f32.mrb[0].mxu0
    %121 = vdwg.mxu0
    %vm122 = vcmask 130048
    %v124 = vsel %vm122, %v42, 0
    %126 = vmatprep.subr.mxu0 0.0
    %127 = vmatpush1.msra.mxu0 %v28
    %128 = vmatprep.subr.mxu0 0.0
    %129 = vmatpush1.msra.mxu0 %v29
    %130 = vmatprep.subr.mxu0 0.0
    %131 = vmatpush1.msra.mxu0 0.0
    %132 = vmatprep.subr.mxu0 0.0
    %133 = vmatpush1.msra.mxu0 0.0
    %134 = vmatprep.subr.mxu0 0.0
    %135 = vmatpush1.msra.mxu0 0.0
    %136 = vmatprep.subr.mxu0 0.0
    %137 = vmatpush1.msra.mxu0 0.0
    %138 = vmatprep.subr.mxu0 0.0
    %139 = vmatpush1.msra.mxu0 0.0
    %140 = vmatprep.subr.mxu0 0.0
    %141 = vmatpush1.msra.mxu0 0.0
    %142 = vmatprep.subr.mxu0 0.0
    %143 = vmatpush1.msra.mxu0 0.0
    %144 = vmatprep.subr.mxu0 0.0
    %145 = vmatpush1.msra.mxu0 0.0
    %146 = vmatprep.subr.mxu0 0.0
    %147 = vmatpush1.msra.mxu0 0.0
    %148 = vmatprep.subr.mxu0 0.0
    %149 = vmatpush1.msra.mxu0 0.0
    %150 = vmatprep.subr.mxu0 0.0
    %151 = vmatpush1.msra.mxu0 0.0
    %152 = vmatprep.subr.mxu0 0.0
    %153 = vmatpush1.msra.mxu0 0.0
    %154 = vmatprep.subr.mxu0 0.0
    %155 = vmatpush1.msra.mxu0 0.0
    %156 = vmatprep.subr.mxu0 0.0
    %157 = vmatpush1.msra.mxu0 0.0
    %158 = vmatprep.subr.mxu0 0.0
    %159 = vmatpush1.msra.mxu0 0.0
    %160 = vmatprep.subr.mxu0 0.0
    %161 = vmatpush1.msra.mxu0 0.0
    %162 = vmatprep.subr.mxu0 0.0
    %163 = vmatpush1.msra.mxu0 0.0
    %164 = vmatprep.subr.mxu0 0.0
    %165 = vmatpush1.msra.mxu0 0.0
    %166 = vmatprep.subr.mxu0 0.0
    %167 = vmatpush1.msra.mxu0 0.0
    %168 = vmatprep.subr.mxu0 0.0
    %169 = vmatpush1.msra.mxu0 0.0
    %170 = vmatprep.subr.mxu0 0.0
    %171 = vmatpush1.msra.mxu0 0.0
    %172 = vmatprep.subr.mxu0 0.0
    %173 = vmatpush1.msra.mxu0 0.0
    %174 = vmatprep.subr.mxu0 0.0
    %175 = vmatpush1.msra.mxu0 0.0
    %176 = vmatprep.subr.mxu0 0.0
    %177 = vmatpush1.msra.mxu0 0.0
    %178 = vmatprep.subr.mxu0 0.0
    %179 = vmatpush1.msra.mxu0 0.0
    %180 = vmatprep.subr.mxu0 0.0
    %181 = vmatpush1.msra.mxu0 0.0
    %182 = vmatprep.subr.mxu0 0.0
    %183 = vmatpush1.msra.mxu0 0.0
    %184 = vmatprep.subr.mxu0 0.0
    %185 = vmatpush1.msra.mxu0 0.0
    %186 = vmatprep.subr.mxu0 0.0
    %187 = vmatpush1.msra.mxu0 0.0
    %188 = vmatprep.subr.mxu0 0.0
    %189 = vmatpush1.msra.mxu0 0.0
    %190 = vmatprep.mubr.f32.mxu0 0.0
    %191 = vmatmul.mubr.f32.gmra.mrb[0].mxu0 %v124
    %v192 = vpop.f32.mrb[0].mxu0
    %v193 = vadd.f32 %v119, %v192
    %v194 = vpop.f32.mrb[0].mxu0
    %195 = vdwg.mxu0
    %v196 = vlaneseq
    %v197 = vshrl.u32 %v196, 7
    %v198 = vsub.s32 0, %v197
    %v199 = vrot.slane %v31, %v198
    %v200 = vadd.f32 %v193, %v199
    %v201 = vmax.f32 %v200, 0.0
    %v202 = vlaneseq
    %v203 = vshrl.u32 %v202, 7
    %v204 = vsub.s32 0, %v203
    %v205 = vrot.slane %v40, %v204
    %vm206 = vcmask 523264
    %v208 = vsel %vm206, %v201, 0
    %210 = vmatprep.subr.mxu0 0.0
    %211 = vmatpush1.msra.mxu0 %v32
    %212 = vmatprep.subr.mxu0 0.0
    %213 = vmatpush1.msra.mxu0 %v33
    %214 = vmatprep.subr.mxu0 0.0
    %215 = vmatpush1.msra.mxu0 %v34
    %216 = vmatprep.subr.mxu0 0.0
    %217 = vmatpush1.msra.mxu0 %v35
    %218 = vmatprep.subr.mxu0 0.0
    %219 = vmatpush1.msra.mxu0 %v36
    %220 = vmatprep.subr.mxu0 0.0
    %221 = vmatpush1.msra.mxu0 %v37
    %222 = vmatprep.subr.mxu0 0.0
    %223 = vmatpush1.msra.mxu0 %v38
    %224 = vmatprep.subr.mxu0 0.0
    %225 = vmatpush1.msra.mxu0 %v39
    %226 = vmatprep.subr.mxu0 0.0
    %227 = vmatpush1.msra.mxu0 0.0
    %228 = vmatprep.subr.mxu0 0.0
    %229 = vmatpush1.msra.mxu0 0.0
    %230 = vmatprep.subr.mxu0 0.0
    %231 = vmatpush1.msra.mxu0 0.0
    %232 = vmatprep.subr.mxu0 0.0
    %233 = vmatpush1.msra.mxu0 0.0
    %234 = vmatprep.subr.mxu0 0.0
    %235 = vmatpush1.msra.mxu0 0.0
    %236 = vmatprep.subr.mxu0 0.0
    %237 = vmatpush1.msra.mxu0 0.0
    %238 = vmatprep.subr.mxu0 0.0
    %239 = vmatpush1.msra.mxu0 0.0
    %240 = vmatprep.subr.mxu0 0.0
    %241 = vmatpush1.msra.mxu0 0.0
    %242 = vmatprep.subr.mxu0 0.0
    %243 = vmatpush1.msra.mxu0 0.0
    %244 = vmatprep.subr.mxu0 0.0
    %245 = vmatpush1.msra.mxu0 0.0
    %246 = vmatprep.subr.mxu0 0.0
    %247 = vmatpush1.msra.mxu0 0.0
    %248 = vmatprep.subr.mxu0 0.0
    %249 = vmatpush1.msra.mxu0 0.0
    %250 = vmatprep.subr.mxu0 0.0
    %251 = vmatpush1.msra.mxu0 0.0
    %252 = vmatprep.subr.mxu0 0.0
    %253 = vmatpush1.msra.mxu0 0.0
    %254 = vmatprep.subr.mxu0 0.0
    %255 = vmatpush1.msra.mxu0 0.0
    %256 = vmatprep.subr.mxu0 0.0
    %257 = vmatpush1.msra.mxu0 0.0
    %258 = vmatprep.subr.mxu0 0.0
    %259 = vmatpush1.msra.mxu0 0.0
    %260 = vmatprep.subr.mxu0 0.0
    %261 = vmatpush1.msra.mxu0 0.0
    %262 = vmatprep.subr.mxu0 0.0
    %263 = vmatpush1.msra.mxu0 0.0
    %264 = vmatprep.subr.mxu0 0.0
    %265 = vmatpush1.msra.mxu0 0.0
    %266 = vmatprep.subr.mxu0 0.0
    %267 = vmatpush1.msra.mxu0 0.0
    %268 = vmatprep.subr.mxu0 0.0
    %269 = vmatpush1.msra.mxu0 0.0
    %270 = vmatprep.subr.mxu0 0.0
    %271 = vmatpush1.msra.mxu0 0.0
    %272 = vmatprep.subr.mxu0 0.0
    %273 = vmatpush1.msra.mxu0 0.0
    %274 = vmatprep.mubr.f32.mxu0 0.0
    %275 = vmatmul.mubr.f32.gmra.mrb[0].mxu0 %v208
    %v276 = vpop.f32.mrb[0].mxu0
    %v277 = vadd.f32 %v205, %v276
    %v278 = vpop.f32.mrb[0].mxu0
    %279 = vdwg.mxu0
    %v280 = vmax.f32 %v277, 0.0
    %v281 = vld [vmem:[#allocation2 + $0x68] sm:$0x1]
    %v282 = vlaneseq
    %v283 = vshrl.u32 %v282, 7
    %v284 = vsub.s32 0, %v283
    %v285 = vrot.slane %v281, %v284
    %v286 = vmul.f32 %v280, %v285
    %vm287 = vcmask 261120
    %v288 = vsel %vm287, %v286, 0.0
    %289 = vadd.xlane.f32.xlu0 %v288
    %v290 = vpop.xlane.xlu0 %289
    %v291 = vlaneseq
    %v292 = vshrl.u32 %v291, 7
    %v293 = vsub.s32 0, %v292
    %v294 = vrot.slane %v41, %v293
    %v295 = vadd.f32 %v290, %v294
    %vm296 = vcmask 7168
    %297 = vst.msk [vmem:[%s3] sm:$0xff] %vm296, %v295
    // Predicated region
    $region18: #{tpu_custom_call.1} parent=1 // pred_check
      _
    $region19: #{tpu_custom_call.1} parent=1 // pred_check_branch
      %299 = sbr.rel (0) target = $region21
    $region20: #{tpu_custom_call.1} parent=1 // pred_region
      _
    $region21: #{tpu_custom_call.1} parent=1 // pred_fallthru
      _
    // Predicated region
    $region22: #{tpu_custom_call.1} parent=1 // pred_check
      _
    $region23: #{tpu_custom_call.1} parent=1 // pred_check_branch
      %301 = sbr.rel (0) target = $region25
    $region24: #{tpu_custom_call.1} parent=1 // pred_region
      _
    $region25: #{tpu_custom_call.1} parent=1 // pred_fallthru
      _
    %302 = vsyncpa [#allocation3], 1

</llo_original>
